<compile_context>
chip_gen: v7x
topology: tpu7x:2x2x1
jax: 0.10.0
libtpu: 0.0.40
codegen_flags: <defaults>
</compile_context>

<pallas_src>
import functools

import jax
import jax.numpy as jnp
from jax.experimental import pallas as pl
from jax.experimental.pallas import tpu as pltpu


def _round_up(x, m):
    return ((x + m - 1) // m) * m


# ---------------------------------------------------------------------------
# Phase 1: whole-batch BatchNorm statistics, folded into fc1.
# ---------------------------------------------------------------------------
def bn_fold_kernel(state_ref, gamma_ref, beta_ref, w1_ref, b1_ref,
                   w1_eff_ref, b1_eff_ref,
                   sum_ref, sumsq_ref, *, inv_n, eps):
    i = pl.program_id(0)

    @pl.when(i == 0)
    def _init():
        sum_ref[...] = jnp.zeros_like(sum_ref)
        sumsq_ref[...] = jnp.zeros_like(sumsq_ref)

    x = state_ref[...]                                   # [TILE_B, S] f32 (zero rows if padded)
    sum_ref[...] += jnp.sum(x, axis=0, keepdims=True)
    sumsq_ref[...] += jnp.sum(x * x, axis=0, keepdims=True)

    @pl.when(i == pl.num_programs(0) - 1)
    def _finalize():
        mean = sum_ref[...] * inv_n                      # [1, S]
        var = sumsq_ref[...] * inv_n - mean * mean       # one-pass biased variance
        scale = jax.lax.rsqrt(var + eps) * gamma_ref[...]
        shift = beta_ref[...] - mean * scale

        w1 = w1_ref[...].astype(jnp.float32)             # [S, H]
        s = w1.shape[0]
        # Row-scale w1 by `scale` without a lane->sublane relayout: build
        # diag(scale) from a 2-D iota and push it through the MXU once.
        rows = jax.lax.broadcasted_iota(jnp.int32, (s, s), 0)
        cols = jax.lax.broadcasted_iota(jnp.int32, (s, s), 1)
        diag = jnp.where(rows == cols, jnp.broadcast_to(scale, (s, s)), 0.0)
        w1_eff = jnp.dot(diag, w1, preferred_element_type=jnp.float32)
        b1_eff = jnp.dot(shift, w1, preferred_element_type=jnp.float32) + b1_ref[...]

        w1_eff_ref[...] = w1_eff.astype(w1_eff_ref.dtype)
        b1_eff_ref[...] = b1_eff


# ---------------------------------------------------------------------------
# Phase 2: batch-tiled 3-layer MLP (BN already folded into fc1).
# ---------------------------------------------------------------------------
def qnetwork_kernel(state_ref, w1e_ref, b1e_ref, w2_ref, b2_ref, w3_ref, b3_ref,
                    out_ref):
    # bf16 MXU operands, f32 accumulation; elementwise math stays f32 (v5e-safe).
    x = state_ref[...].astype(jnp.bfloat16)                              # [TILE_B, S]

    h1 = jnp.dot(x, w1e_ref[...], preferred_element_type=jnp.float32) + b1e_ref[...]
    h1 = jnp.maximum(h1, 0.0)

    # dropout(p=0.0) == identity

    h2 = jnp.dot(h1.astype(jnp.bfloat16), w2_ref[...],
                 preferred_element_type=jnp.float32) + b2_ref[...]
    h2 = jnp.maximum(h2, 0.0)

    out = jnp.dot(h2.astype(jnp.bfloat16), w3_ref[...],
                  preferred_element_type=jnp.float32) + b3_ref[...]
    out_ref[...] = out.astype(out_ref.dtype)                             # [TILE_B, A_pad]


# ---------------------------------------------------------------------------
# Wrapper
# ---------------------------------------------------------------------------
def qnetwork_forward(state, params, *, tile_b=512):
    """QNetwork forward for `state` of shape [B, state_size] (any B).

    The batch is tiled across the grid (amortizing launch/DMA overhead for
    large stacked batches); BatchNorm statistics are still whole-batch.
    """
    state = state.astype(jnp.float32)
    B, S = state.shape
    H = params["w1"].shape[1]
    A = params["w3"].shape[1]
    A_pad = _round_up(A, 128)                 # lane-dense output stores

    # Batch tile: multiple of 8 sublanes; >=512 rows approaches HBM roofline.
    tile_b = _round_up(max(8, min(tile_b, _round_up(B, 8))), 8)
    B_pad = _round_up(B, tile_b)
    n_tiles = B_pad // tile_b
    if B_pad != B:
        state = jnp.pad(state, ((0, B_pad - B), (0, 0)))   # zero rows don't affect sums

    # bf16 weights for native MXU rate + half the weight DMA; biases stay f32.
    w1 = params["w1"].astype(jnp.bfloat16)
    w2 = params["w2"].astype(jnp.bfloat16)
    w3 = params["w3"].astype(jnp.bfloat16)
    b1 = params["b1"].astype(jnp.float32)
    b2 = params["b2"].astype(jnp.float32)
    b3 = params["b3"].astype(jnp.float32)
    gamma = params["gamma"].astype(jnp.float32)
    beta = params["beta"].astype(jnp.float32)
    if A_pad != A:                            # pad fc3 so the kernel output is lane-dense
        w3 = jnp.pad(w3, ((0, 0), (0, A_pad - A)))
        b3 = jnp.pad(b3, ((0, 0), (0, A_pad - A)))

    # ---- phase 1: whole-batch BN stats folded into fc1 --------------------
    w1_eff, b1_eff = pl.pallas_call(
        functools.partial(bn_fold_kernel, inv_n=1.0 / B, eps=1e-5),
        grid=(n_tiles,),
        in_specs=[
            pl.BlockSpec((tile_b, S), lambda i: (i, 0)),   # state tile
            pl.BlockSpec((1, S), lambda i: (0, 0)),        # gamma (resident)
            pl.BlockSpec((1, S), lambda i: (0, 0)),        # beta
            pl.BlockSpec((S, H), lambda i: (0, 0)),        # w1
            pl.BlockSpec((1, H), lambda i: (0, 0)),        # b1
        ],
        out_specs=(
            pl.BlockSpec((S, H), lambda i: (0, 0)),        # w1_eff
            pl.BlockSpec((1, H), lambda i: (0, 0)),        # b1_eff
        ),
        out_shape=(
            jax.ShapeDtypeStruct((S, H), jnp.bfloat16),
            jax.ShapeDtypeStruct((1, H), jnp.float32),
        ),
        scratch_shapes=[pltpu.VMEM((1, S), jnp.float32),   # running sum
                        pltpu.VMEM((1, S), jnp.float32)],  # running sum of squares
        compiler_params=pltpu.CompilerParams(
            dimension_semantics=("arbitrary",)),           # sequential accumulation
    )(state, gamma, beta, w1, b1)

    # ---- phase 2: batch-tiled MLP, weights resident, megacore-parallel ----
    # NOTE: at large hidden_dim, additionally tile w2/w3 over a reduction axis
    # and raise pltpu.CompilerParams(vmem_limit_bytes=...) (v7x: 64 MiB VMEM).
    out_p = pl.pallas_call(
        qnetwork_kernel,
        grid=(n_tiles,),
        in_specs=[
            pl.BlockSpec((tile_b, S), lambda i: (i, 0)),   # state tile (pipelined)
            pl.BlockSpec((S, H), lambda i: (0, 0)),        # w1_eff (resident)
            pl.BlockSpec((1, H), lambda i: (0, 0)),        # b1_eff
            pl.BlockSpec((H, H), lambda i: (0, 0)),        # w2
            pl.BlockSpec((1, H), lambda i: (0, 0)),        # b2
            pl.BlockSpec((H, A_pad), lambda i: (0, 0)),    # w3 (lane-padded)
            pl.BlockSpec((1, A_pad), lambda i: (0, 0)),    # b3 (lane-padded)
        ],
        out_specs=pl.BlockSpec((tile_b, A_pad), lambda i: (i, 0)),
        out_shape=jax.ShapeDtypeStruct((B_pad, A_pad), jnp.float32),
        compiler_params=pltpu.CompilerParams(
            dimension_semantics=("parallel",)),
    )(state, w1_eff, b1_eff, w2, b2, w3, b3)

    return out_p[:B, :A]


# ---------------------------------------------------------------------------
# Parameters / reference
# ---------------------------------------------------------------------------
def init_params(key, state_size, action_size, hidden_dim):
    """Deterministic synthetic parameters (PyTorch Linear-style uniform init).
    Weights are stored bf16 (HBM traffic / MXU rate); biases & BN affine f32."""
    ks = jax.random.split(key, 6)

    def linear(kw, kb, fan_in, fan_out):
        bound = (1.0 / fan_in) ** 0.5
        w = jax.random.uniform(kw, (fan_in, fan_out), jnp.float32, -bound, bound)
        b = jax.random.uniform(kb, (1, fan_out), jnp.float32, -bound, bound)
        return w.astype(jnp.bfloat16), b

    w1, b1 = linear(ks[0], ks[1], state_size, hidden_dim)
    w2, b2 = linear(ks[2], ks[3], hidden_dim, hidden_dim)
    w3, b3 = linear(ks[4], ks[5], hidden_dim, action_size)

    return {
        "gamma": jnp.ones((1, state_size), jnp.float32),   # BatchNorm weight
        "beta": jnp.zeros((1, state_size), jnp.float32),   # BatchNorm bias
        "w1": w1, "b1": b1,
        "w2": w2, "b2": b2,
        "w3": w3, "b3": b3,
    }


def reference_forward(state, params):
    """Pure-JAX f32 reference with the module's semantics (training-mode BN)."""
    f32 = lambda a: a.astype(jnp.float32)
    x = state.astype(jnp.float32)
    mean = jnp.mean(x, axis=0, keepdims=True)
    var = jnp.mean((x - mean) ** 2, axis=0, keepdims=True)
    x = (x - mean) * jax.lax.rsqrt(var + 1e-5) * f32(params["gamma"]) + f32(params["beta"])
    h1 = jnp.maximum(x @ f32(params["w1"]) + f32(params["b1"]), 0.0)
    h2 = jnp.maximum(h1 @ f32(params["w2"]) + f32(params["b2"]), 0.0)
    return h2 @ f32(params["w3"]) + f32(params["b3"])


if __name__ == "__main__":
    key = jax.random.PRNGKey(0)
    k_state, k_params = jax.random.split(key)

    batch = 256          # small demo; tile_b=128 -> 2 grid tiles exercises tiling
    state_size = 16
    action_size = 4
    hidden_dim = 32

    state = jax.random.normal(k_state, (batch, state_size), jnp.float32)
    params = init_params(k_params, state_size, action_size, hidden_dim)

    out = qnetwork_forward(state, params, tile_b=128)
    out = jax.block_until_ready(out)

    ref = reference_forward(state, params)
    assert out.shape == (batch, action_size)
    # Tolerance accounts for bf16 MXU operands (f32 accumulation) vs f32 reference.
    assert jnp.allclose(out, ref, atol=5e-2, rtol=5e-2), "mismatch vs reference"

    print("KERNEL_OK")
</pallas_src>

<mosaic_0001>
module attributes {stable_mosaic.version = 11 : i64} {
  func.func @bn_fold_kernel(%arg0: i32, %arg1: memref<128x16xf32, #tpu.memory_space<vmem>>, %arg2: memref<1x16xf32, #tpu.memory_space<vmem>>, %arg3: memref<1x16xf32, #tpu.memory_space<vmem>>, %arg4: memref<16x32xbf16, #tpu.memory_space<vmem>>, %arg5: memref<1x32xf32, #tpu.memory_space<vmem>>, %arg6: memref<16x32xbf16, #tpu.memory_space<vmem>>, %arg7: memref<1x32xf32, #tpu.memory_space<vmem>>, %arg8: memref<1x16xf32, #tpu.memory_space<vmem>>, %arg9: memref<1x16xf32, #tpu.memory_space<vmem>>) attributes {dimension_semantics = [#tpu.dimension_semantics<arbitrary>], iteration_bounds = array<i64: 2>, scalar_prefetch = 0 : i64, scratch_operands = 2 : i64, tpu.core_type = #tpu.core_type<tc>, window_params = [{transform_indices = @transform_0, window_bounds = array<i64: 128, 16>}, {pipeline_mode = #tpu.pipeline_mode<synchronous>, transform_indices = @transform_1, window_bounds = array<i64: 1, 16>}, {pipeline_mode = #tpu.pipeline_mode<synchronous>, transform_indices = @transform_2, window_bounds = array<i64: 1, 16>}, {pipeline_mode = #tpu.pipeline_mode<synchronous>, transform_indices = @transform_3, window_bounds = array<i64: 16, 32>}, {pipeline_mode = #tpu.pipeline_mode<synchronous>, transform_indices = @transform_4, window_bounds = array<i64: 1, 32>}, {pipeline_mode = #tpu.pipeline_mode<synchronous>, transform_indices = @transform_5, window_bounds = array<i64: 16, 32>}, {pipeline_mode = #tpu.pipeline_mode<synchronous>, transform_indices = @transform_6, window_bounds = array<i64: 1, 32>}]} {
    %c0_i32 = arith.constant 0 : i32
    %0 = arith.cmpi eq, %arg0, %c0_i32 : i32
    %1 = arith.extui %0 : i1 to i32
    %c0_i32_0 = arith.constant 0 : i32
    %2 = arith.cmpi ne, %1, %c0_i32_0 : i32
    scf.if %2 {
      %cst_12 = arith.constant 0.000000e+00 : f32
      %18 = vector.broadcast %cst_12 : f32 to vector<1x16xf32>
      %c0_13 = arith.constant 0 : index
      %c0_14 = arith.constant 0 : index
      %19 = vector.load %arg8[%c0_13, %c0_14] : memref<1x16xf32, #tpu.memory_space<vmem>>, vector<1x16xf32>
      tpu.vector_store %arg8[%c0_13, %c0_14], %18 {strides = array<i32>} : memref<1x16xf32, #tpu.memory_space<vmem>>, vector<1x16xf32>,
      %cst_15 = arith.constant 0.000000e+00 : f32
      %20 = vector.broadcast %cst_15 : f32 to vector<1x16xf32>
      %c0_16 = arith.constant 0 : index
      %c0_17 = arith.constant 0 : index
      %21 = vector.load %arg9[%c0_16, %c0_17] : memref<1x16xf32, #tpu.memory_space<vmem>>, vector<1x16xf32>
      tpu.vector_store %arg9[%c0_16, %c0_17], %20 {strides = array<i32>} : memref<1x16xf32, #tpu.memory_space<vmem>>, vector<1x16xf32>,
    } else {
    }
    %c0 = arith.constant 0 : index
    %c0_1 = arith.constant 0 : index
    %3 = vector.load %arg1[%c0, %c0_1] : memref<128x16xf32, #tpu.memory_space<vmem>>, vector<128x16xf32>
    %c0_2 = arith.constant 0 : index
    %c0_3 = arith.constant 0 : index
    %4 = vector.load %arg8[%c0_2, %c0_3] : memref<1x16xf32, #tpu.memory_space<vmem>>, vector<1x16xf32>
    %cst = arith.constant dense<0.000000e+00> : vector<16xf32>
    %5 = vector.multi_reduction <add>, %3, %cst [0] : vector<128x16xf32> to vector<16xf32>
    %6 = vector.shape_cast %5 : vector<16xf32> to vector<1x16xf32>
    %7 = arith.addf %4, %6 : vector<1x16xf32>
    %c0_4 = arith.constant 0 : index
    %c0_5 = arith.constant 0 : index
    %8 = vector.load %arg8[%c0_4, %c0_5] : memref<1x16xf32, #tpu.memory_space<vmem>>, vector<1x16xf32>
    tpu.vector_store %arg8[%c0_4, %c0_5], %7 {strides = array<i32>} : memref<1x16xf32, #tpu.memory_space<vmem>>, vector<1x16xf32>,
    %c0_6 = arith.constant 0 : index
    %c0_7 = arith.constant 0 : index
    %9 = vector.load %arg9[%c0_6, %c0_7] : memref<1x16xf32, #tpu.memory_space<vmem>>, vector<1x16xf32>
    %10 = arith.mulf %3, %3 : vector<128x16xf32>
    %cst_8 = arith.constant dense<0.000000e+00> : vector<16xf32>
    %11 = vector.multi_reduction <add>, %10, %cst_8 [0] : vector<128x16xf32> to vector<16xf32>
    %12 = vector.shape_cast %11 : vector<16xf32> to vector<1x16xf32>
    %13 = arith.addf %9, %12 : vector<1x16xf32>
    %c0_9 = arith.constant 0 : index
    %c0_10 = arith.constant 0 : index
    %14 = vector.load %arg9[%c0_9, %c0_10] : memref<1x16xf32, #tpu.memory_space<vmem>>, vector<1x16xf32>
    tpu.vector_store %arg9[%c0_9, %c0_10], %13 {strides = array<i32>} : memref<1x16xf32, #tpu.memory_space<vmem>>, vector<1x16xf32>,
    %c1_i32 = arith.constant 1 : i32
    %15 = arith.cmpi eq, %arg0, %c1_i32 : i32
    %16 = arith.extui %15 : i1 to i32
    %c0_i32_11 = arith.constant 0 : i32
    %17 = arith.cmpi ne, %16, %c0_i32_11 : i32
    scf.if %17 {
      %c0_12 = arith.constant 0 : index
      %c0_13 = arith.constant 0 : index
      %18 = vector.load %arg8[%c0_12, %c0_13] : memref<1x16xf32, #tpu.memory_space<vmem>>, vector<1x16xf32>
      %cst_14 = arith.constant 3.906250e-03 : f32
      %19 = vector.broadcast %cst_14 : f32 to vector<1x16xf32>
      %20 = arith.mulf %18, %19 : vector<1x16xf32>
      %c0_15 = arith.constant 0 : index
      %c0_16 = arith.constant 0 : index
      %21 = vector.load %arg9[%c0_15, %c0_16] : memref<1x16xf32, #tpu.memory_space<vmem>>, vector<1x16xf32>
      %cst_17 = arith.constant 3.906250e-03 : f32
      %22 = vector.broadcast %cst_17 : f32 to vector<1x16xf32>
      %23 = arith.mulf %21, %22 : vector<1x16xf32>
      %24 = arith.mulf %20, %20 : vector<1x16xf32>
      %25 = arith.subf %23, %24 : vector<1x16xf32>
      %cst_18 = arith.constant 9.99999974E-6 : f32
      %26 = vector.broadcast %cst_18 : f32 to vector<1x16xf32>
      %27 = arith.addf %25, %26 : vector<1x16xf32>
      %28 = math.rsqrt %27 : vector<1x16xf32>
      %c0_19 = arith.constant 0 : index
      %c0_20 = arith.constant 0 : index
      %29 = vector.load %arg2[%c0_19, %c0_20] : memref<1x16xf32, #tpu.memory_space<vmem>>, vector<1x16xf32>
      %30 = arith.mulf %28, %29 : vector<1x16xf32>
      %c0_21 = arith.constant 0 : index
      %c0_22 = arith.constant 0 : index
      %31 = vector.load %arg3[%c0_21, %c0_22] : memref<1x16xf32, #tpu.memory_space<vmem>>, vector<1x16xf32>
      %32 = arith.mulf %20, %30 : vector<1x16xf32>
      %33 = arith.subf %31, %32 : vector<1x16xf32>
      %c0_23 = arith.constant 0 : index
      %c0_24 = arith.constant 0 : index
      %34 = vector.load %arg4[%c0_23, %c0_24] : memref<16x32xbf16, #tpu.memory_space<vmem>>, vector<16x32xbf16>
      %35 = arith.extf %34 : vector<16x32xbf16> to vector<16x32xf32>
      %36 = tpu.iota {dimensions = array<i32: 0>} : vector<16x16xi32>
      %37 = tpu.iota {dimensions = array<i32: 1>} : vector<16x16xi32>
      %38 = arith.cmpi eq, %36, %37 : vector<16x16xi32>
      %39 = vector.shape_cast %30 : vector<1x16xf32> to vector<1x16xf32>
      %40 = vector.broadcast %39 : vector<1x16xf32> to vector<16x16xf32>
      %cst_25 = arith.constant 0.000000e+00 : f32
      %41 = vector.broadcast %cst_25 : f32 to vector<16x16xf32>
      %42 = arith.select %38, %40, %41 : vector<16x16xi1>, vector<16x16xf32>
      %cst_26 = arith.constant dense<0.000000e+00> : vector<16x32xf32>
      %43 = tpu.matmul %42, %35, %cst_26 {dimension_numbers = #tpu.dot_dimension_numbers<[1], [0], [0], [1], [0, 0, 1, 1], [], []>} : vector<16x16xf32>, vector<16x32xf32>, vector<16x32xf32> -> vector<16x32xf32>
      %cst_27 = arith.constant dense<0.000000e+00> : vector<1x32xf32>
      %44 = tpu.matmul %33, %35, %cst_27 {dimension_numbers = #tpu.dot_dimension_numbers<[1], [0], [0], [1], [0, 0, 1, 1], [], []>} : vector<1x16xf32>, vector<16x32xf32>, vector<1x32xf32> -> vector<1x32xf32>
      %c0_28 = arith.constant 0 : index
      %c0_29 = arith.constant 0 : index
      %45 = vector.load %arg5[%c0_28, %c0_29] : memref<1x32xf32, #tpu.memory_space<vmem>>, vector<1x32xf32>
      %46 = arith.addf %44, %45 : vector<1x32xf32>
      %47 = arith.truncf %43 : vector<16x32xf32> to vector<16x32xbf16>
      %c0_30 = arith.constant 0 : index
      %c0_31 = arith.constant 0 : index
      %48 = vector.load %arg6[%c0_30, %c0_31] : memref<16x32xbf16, #tpu.memory_space<vmem>>, vector<16x32xbf16>
      tpu.vector_store %arg6[%c0_30, %c0_31], %47 {strides = array<i32>} : memref<16x32xbf16, #tpu.memory_space<vmem>>, vector<16x32xbf16>,
      %c0_32 = arith.constant 0 : index
      %c0_33 = arith.constant 0 : index
      %49 = vector.load %arg7[%c0_32, %c0_33] : memref<1x32xf32, #tpu.memory_space<vmem>>, vector<1x32xf32>
      tpu.vector_store %arg7[%c0_32, %c0_33], %46 {strides = array<i32>} : memref<1x32xf32, #tpu.memory_space<vmem>>, vector<1x32xf32>,
    } else {
    }
    return
  }
  func.func @transform_0(%arg0: i32) -> (i32, i32) {
    %c0_i32 = arith.constant 0 : i32
    %c0_i32_0 = arith.constant 0 : i32
    return %arg0, %c0_i32 : i32, i32
  }
  func.func @transform_1(%arg0: i32) -> (i32, i32) {
    %c0_i32 = arith.constant 0 : i32
    %c0_i32_0 = arith.constant 0 : i32
    %c0_i32_1 = arith.constant 0 : i32
    return %c0_i32, %c0_i32_0 : i32, i32
  }
  func.func @transform_2(%arg0: i32) -> (i32, i32) {
    %c0_i32 = arith.constant 0 : i32
    %c0_i32_0 = arith.constant 0 : i32
    %c0_i32_1 = arith.constant 0 : i32
    return %c0_i32, %c0_i32_0 : i32, i32
  }
  func.func @transform_3(%arg0: i32) -> (i32, i32) {
    %c0_i32 = arith.constant 0 : i32
    %c0_i32_0 = arith.constant 0 : i32
    %c0_i32_1 = arith.constant 0 : i32
    return %c0_i32, %c0_i32_0 : i32, i32
  }
  func.func @transform_4(%arg0: i32) -> (i32, i32) {
    %c0_i32 = arith.constant 0 : i32
    %c0_i32_0 = arith.constant 0 : i32
    %c0_i32_1 = arith.constant 0 : i32
    return %c0_i32, %c0_i32_0 : i32, i32
  }
  func.func @transform_5(%arg0: i32) -> (i32, i32) {
    %c0_i32 = arith.constant 0 : i32
    %c0_i32_0 = arith.constant 0 : i32
    %c0_i32_1 = arith.constant 0 : i32
    return %c0_i32, %c0_i32_0 : i32, i32
  }
  func.func @transform_6(%arg0: i32) -> (i32, i32) {
    %c0_i32 = arith.constant 0 : i32
    %c0_i32_0 = arith.constant 0 : i32
    %c0_i32_1 = arith.constant 0 : i32
    return %c0_i32, %c0_i32_0 : i32, i32
  }
}

</mosaic_0001>

<llo_original>
// kernel: tpu_custom_call.1
$region0: #{tpu_custom_call.1}
  #allocation0 [shape = 'u32[]', space=smem, size = 0x4, offset = 0x4, fixed_abs, tag = 'smem constant byte address 0x4 - core index']
  #allocation1 [shape = 'u32[144,128]{1,0:T(1,128)}', space=vmem, size = 0x12000, scoped, tag = 'internal scratch']
  #allocation2 [shape = 'f32[1,16]{1,0:T(1,128)}', space=vmem, size = 0x200, scoped, tag = 'scratch operand']
  #allocation3 [shape = 'f32[1,16]{1,0:T(1,128)}', space=vmem, size = 0x200, scoped, tag = 'scratch operand']
  %s0 = inlined_call_operand.vmem [shape: f32[256,16], index: 0, kind: input, shape index: {}]
  %s1 = inlined_call_operand.vmem [shape: f32[1,16], index: 1, kind: input, shape index: {}]
  %s2 = inlined_call_operand.vmem [shape: f32[1,16], index: 2, kind: input, shape index: {}]
  %s3 = inlined_call_operand.vmem [shape: bf16[16,32], index: 3, kind: input, shape index: {}]
  %s4 = inlined_call_operand.vmem [shape: f32[1,32], index: 4, kind: input, shape index: {}]
  %s5 = inlined_call_operand.hbm [shape: bf16[16,32], index: 5, kind: output, shape index: {0}]
  %s6 = inlined_call_operand.hbm [shape: f32[1,32], index: 6, kind: output, shape index: {1}]
  %7 = xla_tuple %s5, %s6
  %s8 = sld [smem:[#allocation0]]
  $region69: #{tpu_custom_call.1} parent=0
    _
  %s10 = ssub.s32 1, %s8
  %s11 = scalar_select 0, %s10, %s8
  $region1: #{tpu_custom_call.1} parent=0
    #allocation4 [shape = 'u8[4096]{0}', space=vmem, size = 0x1000, scoped, tag = 'output window, operand 0, single buffered']
    #allocation5 [shape = 's32[2]{0}', space=sflag, size = 0x8, scoped, tag = 'scoped memory for tpu_custom_call.1']
    #allocation6 [shape = 'u8[512]{0}', space=vmem, size = 0x400, scoped, tag = 'output window, operand 1, single buffered']
    #allocation7 [shape = 's32[1]{0}', space=sflag, size = 0x4, scoped, tag = 'scoped memory for tpu_custom_call.1']
    %12 = vsyncpa [#allocation5], 0
    %13 = vsyncpa [#allocation7], 0
    loop: start=0, step=1, limit=4
    $region2: #{tpu_custom_call.1} parent=1 // loop_pre_header
      _
    $region3: #{tpu_custom_call.1} parent=1 // loop_header
      %s15 = sphi 0, %s19
      %p16 = scmp.ge.s32.totalorder %s15, 4
      %s25 = sphi 0, %s27
      %s28 = sphi 0, %s25
      %s29 = sphi 0, %s28
      %s45 = sphi 0, %s29
      %s49 = sphi 0, %s49
      %s51 = sphi 0, %s49
      %s52 = sphi 0, %s51
      %s66 = sphi 0, %s52
      %s70 = sphi 0, %s70
      %s72 = sphi 0, %s70
      %s73 = sphi 0, %s72
      %s87 = sphi 0, %s73
      %s91 = sphi 0, %s91
      %s93 = sphi 0, %s91
      %s94 = sphi 0, %s93
      %s108 = sphi 0, %s94
      %s112 = sphi 0, %s112
      %s114 = sphi 0, %s112
      %s115 = sphi 0, %s114
      %s129 = sphi 0, %s115
      %s133 = sphi 0, %s133
      %s135 = sphi 0, %s133
      %s136 = sphi 0, %s135
      %s150 = sphi 0, %s136
      %s154 = sphi 0, %s154
      %s156 = sphi 0, %s154
      %s157 = sphi 0, %s156
      %s171 = sphi 0, %s157
    $region4: #{tpu_custom_call.1} parent=1 // loop_header_branch
      %18 = sbr.rel (%p16) target = $region8
    $region5: #{tpu_custom_call.1} parent=1 // loop_body
      %s20 = ssub.s32 %s15, 1
      %s21 = ssub.s32 %s15, 2
      %s22 = sadd.s32 %s15, 1
      %s23 = ssub.s32 %s15, %s22
      %p24 = scmp.eq.s32.totalorder %s23, 0
      %s26 = sadd.s32 %s25, 1
      %s27 = scalar_select %p24, %s25, %s26
      %p30 = pneg %p24
      %p31 = scmp.eq.s32.totalorder %s15, 1
      %p32 = por %p30, %p31
      %p33 = scmp.ne.s32.totalorder %s25, %s28
      %p34 = scmp.eq.s32.totalorder %s15, 0
      %p35 = por %p33, %p34
      %p36 = scmp.ne.s32.totalorder %s25, %s28
      %p37 = scmp.eq.s32.totalorder %s20, 1
      %p38 = por %p36, %p37
      %p39 = scmp.ne.s32.totalorder %s28, %s29
      %p40 = scmp.eq.s32.totalorder %s20, 0
      %p41 = por %p39, %p40
      %p42 = scmp.ne.s32.totalorder %s28, %s29
      %p43 = scmp.eq.s32.totalorder %s21, 1
      %p44 = por %p42, %p43
      %p46 = scmp.ne.s32.totalorder %s29, %s45
      %p47 = scmp.eq.s32.totalorder %s21, 0
      %p48 = por %p46, %p47
      %s50 = sadd.s32 %s49, 1
      %p53 = scmp.eq.s32.totalorder %s15, 1
      %p54 = scmp.ne.s32.totalorder %s49, %s51
      %p55 = scmp.eq.s32.totalorder %s15, 0
      %p56 = por %p54, %p55
      %p57 = scmp.ne.s32.totalorder %s49, %s51
      %p58 = scmp.eq.s32.totalorder %s20, 1
      %p59 = por %p57, %p58
      %p60 = scmp.ne.s32.totalorder %s51, %s52
      %p61 = scmp.eq.s32.totalorder %s20, 0
      %p62 = por %p60, %p61
      %p63 = scmp.ne.s32.totalorder %s51, %s52
      %p64 = scmp.eq.s32.totalorder %s21, 1
      %p65 = por %p63, %p64
      %p67 = scmp.ne.s32.totalorder %s52, %s66
      %p68 = scmp.eq.s32.totalorder %s21, 0
      %p69 = por %p67, %p68
      %s71 = sadd.s32 %s70, 1
      %p74 = scmp.eq.s32.totalorder %s15, 1
      %p75 = scmp.ne.s32.totalorder %s70, %s72
      %p76 = scmp.eq.s32.totalorder %s15, 0
      %p77 = por %p75, %p76
      %p78 = scmp.ne.s32.totalorder %s70, %s72
      %p79 = scmp.eq.s32.totalorder %s20, 1
      %p80 = por %p78, %p79
      %p81 = scmp.ne.s32.totalorder %s72, %s73
      %p82 = scmp.eq.s32.totalorder %s20, 0
      %p83 = por %p81, %p82
      %p84 = scmp.ne.s32.totalorder %s72, %s73
      %p85 = scmp.eq.s32.totalorder %s21, 1
      %p86 = por %p84, %p85
      %p88 = scmp.ne.s32.totalorder %s73, %s87
      %p89 = scmp.eq.s32.totalorder %s21, 0
      %p90 = por %p88, %p89
      %s92 = sadd.s32 %s91, 1
      %p95 = scmp.eq.s32.totalorder %s15, 1
      %p96 = scmp.ne.s32.totalorder %s91, %s93
      %p97 = scmp.eq.s32.totalorder %s15, 0
      %p98 = por %p96, %p97
      %p99 = scmp.ne.s32.totalorder %s91, %s93
      %p100 = scmp.eq.s32.totalorder %s20, 1
      %p101 = por %p99, %p100
      %p102 = scmp.ne.s32.totalorder %s93, %s94
      %p103 = scmp.eq.s32.totalorder %s20, 0
      %p104 = por %p102, %p103
      %p105 = scmp.ne.s32.totalorder %s93, %s94
      %p106 = scmp.eq.s32.totalorder %s21, 1
      %p107 = por %p105, %p106
      %p109 = scmp.ne.s32.totalorder %s94, %s108
      %p110 = scmp.eq.s32.totalorder %s21, 0
      %p111 = por %p109, %p110
      %s113 = sadd.s32 %s112, 1
      %p116 = scmp.eq.s32.totalorder %s15, 1
      %p117 = scmp.ne.s32.totalorder %s112, %s114
      %p118 = scmp.eq.s32.totalorder %s15, 0
      %p119 = por %p117, %p118
      %p120 = scmp.ne.s32.totalorder %s112, %s114
      %p121 = scmp.eq.s32.totalorder %s20, 1
      %p122 = por %p120, %p121
      %p123 = scmp.ne.s32.totalorder %s114, %s115
      %p124 = scmp.eq.s32.totalorder %s20, 0
      %p125 = por %p123, %p124
      %p126 = scmp.ne.s32.totalorder %s114, %s115
      %p127 = scmp.eq.s32.totalorder %s21, 1
      %p128 = por %p126, %p127
      %p130 = scmp.ne.s32.totalorder %s115, %s129
      %p131 = scmp.eq.s32.totalorder %s21, 0
      %p132 = por %p130, %p131
      %s134 = sadd.s32 %s133, 1
      %p137 = scmp.eq.s32.totalorder %s15, 1
      %p138 = scmp.ne.s32.totalorder %s133, %s135
      %p139 = scmp.eq.s32.totalorder %s15, 0
      %p140 = por %p138, %p139
      %p141 = scmp.ne.s32.totalorder %s133, %s135
      %p142 = scmp.eq.s32.totalorder %s20, 1
      %p143 = por %p141, %p142
      %p144 = scmp.ne.s32.totalorder %s135, %s136
      %p145 = scmp.eq.s32.totalorder %s20, 0
      %p146 = por %p144, %p145
      %p147 = scmp.ne.s32.totalorder %s135, %s136
      %p148 = scmp.eq.s32.totalorder %s21, 1
      %p149 = por %p147, %p148
      %p151 = scmp.ne.s32.totalorder %s136, %s150
      %p152 = scmp.eq.s32.totalorder %s21, 0
      %p153 = por %p151, %p152
      %s155 = sadd.s32 %s154, 1
      %p158 = scmp.eq.s32.totalorder %s15, 1
      %p159 = scmp.ne.s32.totalorder %s154, %s156
      %p160 = scmp.eq.s32.totalorder %s15, 0
      %p161 = por %p159, %p160
      %p162 = scmp.ne.s32.totalorder %s154, %s156
      %p163 = scmp.eq.s32.totalorder %s20, 1
      %p164 = por %p162, %p163
      %p165 = scmp.ne.s32.totalorder %s156, %s157
      %p166 = scmp.eq.s32.totalorder %s20, 0
      %p167 = por %p165, %p166
      %p168 = scmp.ne.s32.totalorder %s156, %s157
      %p169 = scmp.eq.s32.totalorder %s21, 1
      %p170 = por %p168, %p169
      %p172 = scmp.ne.s32.totalorder %s157, %s171
      %p173 = scmp.eq.s32.totalorder %s21, 0
      %p174 = por %p172, %p173
      %p175 = scmp.le.s32.totalorder 1, %s15
      %p176 = scmp.lt.s32.totalorder %s15, 3
      %p177 = pnand %p175, %p176
      %p178 = pneg %p177
      // Predicated region
      $region9: #{tpu_custom_call.1} parent=5 // pred_check
        _
      $region10: #{tpu_custom_call.1} parent=5 // pred_check_branch
        %180 = sbr.rel (%p177) target = $region12
      $region11: #{tpu_custom_call.1} parent=5 // pred_region
        %s181 = ssub.s32 %s15, 1
        // Predicated region
        $region13: #{tpu_custom_call.1} parent=11 // pred_check
          %p182 = pneg %p62
        $region14: #{tpu_custom_call.1} parent=11 // pred_check_branch
          %184 = sbr.rel (%p182) target = $region16
        $region15: #{tpu_custom_call.1} parent=11 // pred_region
          _
        $region16: #{tpu_custom_call.1} parent=11 // pred_fallthru
          _
        // Predicated region
        $region17: #{tpu_custom_call.1} parent=11 // pred_check
          %p185 = pneg %p83
        $region18: #{tpu_custom_call.1} parent=11 // pred_check_branch
          %187 = sbr.rel (%p185) target = $region20
        $region19: #{tpu_custom_call.1} parent=11 // pred_region
          _
        $region20: #{tpu_custom_call.1} parent=11 // pred_fallthru
          _
        // Predicated region
        $region21: #{tpu_custom_call.1} parent=11 // pred_check
          %p188 = pneg %p104
        $region22: #{tpu_custom_call.1} parent=11 // pred_check_branch
          %190 = sbr.rel (%p188) target = $region24
        $region23: #{tpu_custom_call.1} parent=11 // pred_region
          _
        $region24: #{tpu_custom_call.1} parent=11 // pred_fallthru
          _
        // Predicated region
        $region25: #{tpu_custom_call.1} parent=11 // pred_check
          %p191 = pneg %p125
        $region26: #{tpu_custom_call.1} parent=11 // pred_check_branch
          %193 = sbr.rel (%p191) target = $region28
        $region27: #{tpu_custom_call.1} parent=11 // pred_region
          _
        $region28: #{tpu_custom_call.1} parent=11 // pred_fallthru
          _
      $region12: #{tpu_custom_call.1} parent=5 // pred_fallthru
        _
      %p194 = scmp.lt.s32.totalorder %s15, 2
      // Predicated region
      $region29: #{tpu_custom_call.1} parent=5 // pred_check
        %p195 = pneg %p194
      $region30: #{tpu_custom_call.1} parent=5 // pred_check_branch
        %197 = sbr.rel (%p195) target = $region32
      $region31: #{tpu_custom_call.1} parent=5 // pred_region
        // Predicated region
        $region33: #{tpu_custom_call.1} parent=31 // pred_check
          %p198 = pneg %p35
        $region34: #{tpu_custom_call.1} parent=31 // pred_check_branch
          %200 = sbr.rel (%p198) target = $region36
        $region35: #{tpu_custom_call.1} parent=31 // pred_region
          %s201 = smul.u32 16, %s15
          %p202 = scmp.lt.s32.totalorder %s201, 31
          %s203 = scalar_select %p202, %s201, 31
          %s204 = smul.addr %s203, 8
          %s205 = scalar_lea.vmem %s0, %s204
          %s206 = smul.u32 16, %s15
        $region36: #{tpu_custom_call.1} parent=31 // pred_fallthru
          _
      $region32: #{tpu_custom_call.1} parent=5 // pred_fallthru
        _
      %p207 = scmp.le.s32.totalorder 1, %s15
      %p208 = scmp.lt.s32.totalorder %s15, 3
      %p209 = pnand %p207, %p208
      %p210 = pneg %p209
      // Predicated region
      $region37: #{tpu_custom_call.1} parent=5 // pred_check
        _
      $region38: #{tpu_custom_call.1} parent=5 // pred_check_branch
        %212 = sbr.rel (%p209) target = $region40
      $region39: #{tpu_custom_call.1} parent=5 // pred_region
        %s213 = ssub.s32 %s15, 1
        %s214 = smul.u32 16, %s20
        %p215 = scmp.lt.s32.totalorder %s214, 31
        %s216 = scalar_select %p215, %s214, 31
        %s217 = smul.addr %s216, 8
        %s218 = scalar_lea.vmem %s0, %s217
        %p219 = pneg %p41
        %p220 = pneg %p38
        %p221 = pneg %p62
        %p222 = pneg %p59
        %p223 = pneg %p83
        %p224 = pneg %p80
        %p225 = pneg %p104
        %p226 = pneg %p101
        %p227 = pneg %p125
        %p228 = pneg %p122
        %p229 = pneg %p146
        %p230 = pneg %p143
        %p231 = pneg %p167
        %p232 = pneg %p164
        %s233 = smul.u32 16, %s20
        %p234 = scmp.lt.s32.totalorder %s233, 31
        %s235 = scalar_select %p234, %s233, 31
        %s236 = smul.addr %s235, 8
        %s237 = scalar_lea.vmem %s0, %s236
        %s238 = smul.u32 16, %s20
        %p239 = scmp.eq.s32.totalorder %s20, 0
        // Predicated region
        $region41: #{tpu_custom_call.1} parent=39 // pred_check
          %p240 = pneg %p239
        $region42: #{tpu_custom_call.1} parent=39 // pred_check_branch
          %242 = sbr.rel (%p240) target = $region44
        $region43: #{tpu_custom_call.1} parent=39 // pred_region
          %vm243 = vcmask 122880
          %244 = vst.msk [vmem:[#allocation2] sm:$0x1] %vm243, 0.0
          %245 = vst.msk [vmem:[#allocation3] sm:$0x1] %vm243, 0.0
        $region44: #{tpu_custom_call.1} parent=39 // pred_fallthru
          _
        %v246 = vld [vmem:[%s237] sm:$0xff]
        %v247 = vld [vmem:[%s237 + $0x8] sm:$0xff]
        %v248 = vld [vmem:[%s237 + $0x10] sm:$0xff]
        %v249 = vld [vmem:[%s237 + $0x18] sm:$0xff]
        %v250 = vld [vmem:[%s237 + $0x20] sm:$0xff]
        %v251 = vld [vmem:[%s237 + $0x28] sm:$0xff]
        %v252 = vld [vmem:[%s237 + $0x30] sm:$0xff]
        %v253 = vld [vmem:[%s237 + $0x38] sm:$0xff]
        %v254 = vld [vmem:[%s237 + $0x40] sm:$0xff]
        %v255 = vld [vmem:[%s237 + $0x48] sm:$0xff]
        %v256 = vld [vmem:[%s237 + $0x50] sm:$0xff]
        %v257 = vld [vmem:[%s237 + $0x58] sm:$0xff]
        %v258 = vld [vmem:[%s237 + $0x60] sm:$0xff]
        %v259 = vld [vmem:[%s237 + $0x68] sm:$0xff]
        %v260 = vld [vmem:[%s237 + $0x70] sm:$0xff]
        %v261 = vld [vmem:[%s237 + $0x78] sm:$0xff]
        %v262 = vld [vmem:[#allocation2] sm:$0x1]
        %vm263 = vcmask 130048
        %v264 = vsel %vm263, %v246, 0.0
        %v265 = vsel %vm263, %v247, 0.0
        %v266 = vadd.f32 %v264, %v265
        %v267 = vsel %vm263, %v248, 0.0
        %v268 = vadd.f32 %v266, %v267
        %v269 = vsel %vm263, %v249, 0.0
        %v270 = vadd.f32 %v268, %v269
        %v271 = vsel %vm263, %v250, 0.0
        %v272 = vadd.f32 %v270, %v271
        %v273 = vsel %vm263, %v251, 0.0
        %v274 = vadd.f32 %v272, %v273
        %v275 = vsel %vm263, %v252, 0.0
        %v276 = vadd.f32 %v274, %v275
        %v277 = vsel %vm263, %v253, 0.0
        %v278 = vadd.f32 %v276, %v277
        %v279 = vsel %vm263, %v254, 0.0
        %v280 = vadd.f32 %v278, %v279
        %v281 = vsel %vm263, %v255, 0.0
        %v282 = vadd.f32 %v280, %v281
        %v283 = vsel %vm263, %v256, 0.0
        %v284 = vadd.f32 %v282, %v283
        %v285 = vsel %vm263, %v257, 0.0
        %v286 = vadd.f32 %v284, %v285
        %v287 = vsel %vm263, %v258, 0.0
        %v288 = vadd.f32 %v286, %v287
        %v289 = vsel %vm263, %v259, 0.0
        %v290 = vadd.f32 %v288, %v289
        %v291 = vsel %vm263, %v260, 0.0
        %v292 = vadd.f32 %v290, %v291
        %v293 = vsel %vm263, %v261, 0.0
        %v294 = vadd.f32 %v292, %v293
        %v295 = vrot.slane %v294, 4
        %v296 = vadd.f32 %v294, %v295
        %v297 = vrot.slane %v296, 2
        %v298 = vadd.f32 %v296, %v297
        %v299 = vrot.slane %v298, 1
        %v300 = vadd.f32 %v298, %v299
        %v301 = vadd.f32 %v262, %v300
        %vm302 = vcmask 122880
        %303 = vst.msk [vmem:[#allocation2] sm:$0x1] %vm302, %v301
        %v304 = vld [vmem:[#allocation3] sm:$0x1]
        %v305 = vmul.f32 %v246, %v246
        %v306 = vmul.f32 %v247, %v247
        %v307 = vmul.f32 %v248, %v248
        %v308 = vmul.f32 %v249, %v249
        %v309 = vmul.f32 %v250, %v250
        %v310 = vmul.f32 %v251, %v251
        %v311 = vmul.f32 %v252, %v252
        %v312 = vmul.f32 %v253, %v253
        %v313 = vmul.f32 %v254, %v254
        %v314 = vmul.f32 %v255, %v255
        %v315 = vmul.f32 %v256, %v256
        %v316 = vmul.f32 %v257, %v257
        %v317 = vmul.f32 %v258, %v258
        %v318 = vmul.f32 %v259, %v259
        %v319 = vmul.f32 %v260, %v260
        %v320 = vmul.f32 %v261, %v261
        %v321 = vsel %vm263, %v305, 0.0
        %v322 = vsel %vm263, %v306, 0.0
        %v323 = vadd.f32 %v321, %v322
        %v324 = vsel %vm263, %v307, 0.0
        %v325 = vadd.f32 %v323, %v324
        %v326 = vsel %vm263, %v308, 0.0
        %v327 = vadd.f32 %v325, %v326
        %v328 = vsel %vm263, %v309, 0.0
        %v329 = vadd.f32 %v327, %v328
        %v330 = vsel %vm263, %v310, 0.0
        %v331 = vadd.f32 %v329, %v330
        %v332 = vsel %vm263, %v311, 0.0
        %v333 = vadd.f32 %v331, %v332
        %v334 = vsel %vm263, %v312, 0.0
        %v335 = vadd.f32 %v333, %v334
        %v336 = vsel %vm263, %v313, 0.0
        %v337 = vadd.f32 %v335, %v336
        %v338 = vsel %vm263, %v314, 0.0
        %v339 = vadd.f32 %v337, %v338
        %v340 = vsel %vm263, %v315, 0.0
        %v341 = vadd.f32 %v339, %v340
        %v342 = vsel %vm263, %v316, 0.0
        %v343 = vadd.f32 %v341, %v342
        %v344 = vsel %vm263, %v317, 0.0
        %v345 = vadd.f32 %v343, %v344
        %v346 = vsel %vm263, %v318, 0.0
        %v347 = vadd.f32 %v345, %v346
        %v348 = vsel %vm263, %v319, 0.0
        %v349 = vadd.f32 %v347, %v348
        %v350 = vsel %vm263, %v320, 0.0
        %v351 = vadd.f32 %v349, %v350
        %v352 = vrot.slane %v351, 4
        %v353 = vadd.f32 %v351, %v352
        %v354 = vrot.slane %v353, 2
        %v355 = vadd.f32 %v353, %v354
        %v356 = vrot.slane %v355, 1
        %v357 = vadd.f32 %v355, %v356
        %v358 = vadd.f32 %v304, %v357
        %359 = vst.msk [vmem:[#allocation3] sm:$0x1] %vm302, %v358
        %p360 = scmp.eq.s32.totalorder %s20, 1
        // Predicated region
        $region45: #{tpu_custom_call.1} parent=39 // pred_check
          %p361 = pneg %p360
        $region46: #{tpu_custom_call.1} parent=39 // pred_check_branch
          %363 = sbr.rel (%p361) target = $region48
        $region47: #{tpu_custom_call.1} parent=39 // pred_region
          %v364 = vld [vmem:[#allocation2] sm:$0x1]
          %v365 = vmul.f32 %v364, 0.00390625
          %v366 = vld [vmem:[#allocation3] sm:$0x1]
          %v367 = vmul.f32 %v366, 0.00390625
          %v368 = vmul.f32 %v365, %v365
          %v369 = vsub.f32 %v367, %v368
          %v370 = vadd.f32 %v369, 1e-05
          %v371 = vrsqrt.pop %v370
          %v372 = vld [vmem:[%s1] sm:$0x1]
          %v373 = vmul.f32 %v371, %v372
          %v374 = vld [vmem:[%s2] sm:$0x1]
          %v375 = vmul.f32 %v365, %v373
          %v376 = vsub.f32 %v374, %v375
          %v377 = vld [vmem:[%s3] sm:$0xf]
          %v378 = vld [vmem:[%s3 + $0x4] sm:$0xf]
          %v379 = vunpack.c.l.bf16 %v377
          %v380 = vunpack.c.l.bf16 %v378
          %v381 = vlaneseq
          %v382 = vshrl.u32 %v381, 7
          %v383 = vadd.s32 %v382, 8
          %v384 = vlaneseq
          %v385 = vand.u32 %v384, 127
          %vm386 = vcmp.eq.s32.totalorder %v382, %v385
          %vm387 = vcmp.eq.s32.totalorder %v383, %v385
          %v389 = vlaneseq
          %v390 = vshrl.u32 %v389, 7
          %v391 = vsub.s32 0, %v390
          %v392 = vrot.slane %v373, %v391
          %v394 = vsel %vm386, %v392, 0.0
          %v395 = vsel %vm387, %v392, 0.0
          %v397 = vsel %vm263, %v394, 0
          %v400 = vsel %vm263, %v395, 0
          %402 = vmatprep.subr.mxu0 0.0
          %403 = vmatpush1.msra.mxu0 %v379
          %404 = vmatprep.subr.mxu0 0.0
          %405 = vmatpush1.msra.mxu0 %v380
          %406 = vmatprep.subr.mxu0 0.0
          %407 = vmatpush1.msra.mxu0 0.0
          %408 = vmatprep.subr.mxu0 0.0
          %409 = vmatpush1.msra.mxu0 0.0
          %410 = vmatprep.subr.mxu0 0.0
          %411 = vmatpush1.msra.mxu0 0.0
          %412 = vmatprep.subr.mxu0 0.0
          %413 = vmatpush1.msra.mxu0 0.0
          %414 = vmatprep.subr.mxu0 0.0
          %415 = vmatpush1.msra.mxu0 0.0
          %416 = vmatprep.subr.mxu0 0.0
          %417 = vmatpush1.msra.mxu0 0.0
          %418 = vmatprep.subr.mxu0 0.0
          %419 = vmatpush1.msra.mxu0 0.0
          %420 = vmatprep.subr.mxu0 0.0
          %421 = vmatpush1.msra.mxu0 0.0
          %422 = vmatprep.subr.mxu0 0.0
          %423 = vmatpush1.msra.mxu0 0.0
          %424 = vmatprep.subr.mxu0 0.0
          %425 = vmatpush1.msra.mxu0 0.0
          %426 = vmatprep.subr.mxu0 0.0
          %427 = vmatpush1.msra.mxu0 0.0
          %428 = vmatprep.subr.mxu0 0.0
          %429 = vmatpush1.msra.mxu0 0.0
          %430 = vmatprep.subr.mxu0 0.0
          %431 = vmatpush1.msra.mxu0 0.0
          %432 = vmatprep.subr.mxu0 0.0
          %433 = vmatpush1.msra.mxu0 0.0
          %434 = vmatprep.subr.mxu0 0.0
          %435 = vmatpush1.msra.mxu0 0.0
          %436 = vmatprep.subr.mxu0 0.0
          %437 = vmatpush1.msra.mxu0 0.0
          %438 = vmatprep.subr.mxu0 0.0
          %439 = vmatpush1.msra.mxu0 0.0
          %440 = vmatprep.subr.mxu0 0.0
          %441 = vmatpush1.msra.mxu0 0.0
          %442 = vmatprep.subr.mxu0 0.0
          %443 = vmatpush1.msra.mxu0 0.0
          %444 = vmatprep.subr.mxu0 0.0
          %445 = vmatpush1.msra.mxu0 0.0
          %446 = vmatprep.subr.mxu0 0.0
          %447 = vmatpush1.msra.mxu0 0.0
          %448 = vmatprep.subr.mxu0 0.0
          %449 = vmatpush1.msra.mxu0 0.0
          %450 = vmatprep.subr.mxu0 0.0
          %451 = vmatpush1.msra.mxu0 0.0
          %452 = vmatprep.subr.mxu0 0.0
          %453 = vmatpush1.msra.mxu0 0.0
          %454 = vmatprep.subr.mxu0 0.0
          %455 = vmatpush1.msra.mxu0 0.0
          %456 = vmatprep.subr.mxu0 0.0
          %457 = vmatpush1.msra.mxu0 0.0
          %458 = vmatprep.subr.mxu0 0.0
          %459 = vmatpush1.msra.mxu0 0.0
          %460 = vmatprep.subr.mxu0 0.0
          %461 = vmatpush1.msra.mxu0 0.0
          %462 = vmatprep.subr.mxu0 0.0
          %463 = vmatpush1.msra.mxu0 0.0
          %464 = vmatprep.subr.mxu0 0.0
          %465 = vmatpush1.msra.mxu0 0.0
          %466 = vmatprep.mubr.f32.mxu0 0.0
          %467 = vmatmul.mubr.f32.gmra.mrb[0].mxu0 %v397
          %v468 = vpop.f32.mrb[0].mxu0
          %v469 = vadd.f32 0.0, %v468
          %v470 = vpop.f32.mrb[0].mxu0
          %471 = vmatprep.mubr.f32.mxu0 0.0
          %472 = vmatmul.mubr.f32.gmra.mrb[0].mxu0 %v400
          %v473 = vpop.f32.mrb[0].mxu0
          %v474 = vadd.f32 0.0, %v473
          %v475 = vpop.f32.mrb[0].mxu0
          %476 = vdwg.mxu0
          %v477 = vld [vmem:[%s4] sm:$0x1]
          %v479 = vsel %vm263, %v376, 0
          %481 = vmatprep.subr.mxu0 0.0
          %482 = vmatpush1.msra.mxu0 %v379
          %483 = vmatprep.subr.mxu0 0.0
          %484 = vmatpush1.msra.mxu0 %v380
          %485 = vmatprep.subr.mxu0 0.0
          %486 = vmatpush1.msra.mxu0 0.0
          %487 = vmatprep.subr.mxu0 0.0
          %488 = vmatpush1.msra.mxu0 0.0
          %489 = vmatprep.subr.mxu0 0.0
          %490 = vmatpush1.msra.mxu0 0.0
          %491 = vmatprep.subr.mxu0 0.0
          %492 = vmatpush1.msra.mxu0 0.0
          %493 = vmatprep.subr.mxu0 0.0
          %494 = vmatpush1.msra.mxu0 0.0
          %495 = vmatprep.subr.mxu0 0.0
          %496 = vmatpush1.msra.mxu0 0.0
          %497 = vmatprep.subr.mxu0 0.0
          %498 = vmatpush1.msra.mxu0 0.0
          %499 = vmatprep.subr.mxu0 0.0
          %500 = vmatpush1.msra.mxu0 0.0
          %501 = vmatprep.subr.mxu0 0.0
          %502 = vmatpush1.msra.mxu0 0.0
          %503 = vmatprep.subr.mxu0 0.0
          %504 = vmatpush1.msra.mxu0 0.0
          %505 = vmatprep.subr.mxu0 0.0
          %506 = vmatpush1.msra.mxu0 0.0
          %507 = vmatprep.subr.mxu0 0.0
          %508 = vmatpush1.msra.mxu0 0.0
          %509 = vmatprep.subr.mxu0 0.0
          %510 = vmatpush1.msra.mxu0 0.0
          %511 = vmatprep.subr.mxu0 0.0
          %512 = vmatpush1.msra.mxu0 0.0
          %513 = vmatprep.subr.mxu0 0.0
          %514 = vmatpush1.msra.mxu0 0.0
          %515 = vmatprep.subr.mxu0 0.0
          %516 = vmatpush1.msra.mxu0 0.0
          %517 = vmatprep.subr.mxu0 0.0
          %518 = vmatpush1.msra.mxu0 0.0
          %519 = vmatprep.subr.mxu0 0.0
          %520 = vmatpush1.msra.mxu0 0.0
          %521 = vmatprep.subr.mxu0 0.0
          %522 = vmatpush1.msra.mxu0 0.0
          %523 = vmatprep.subr.mxu0 0.0
          %524 = vmatpush1.msra.mxu0 0.0
          %525 = vmatprep.subr.mxu0 0.0
          %526 = vmatpush1.msra.mxu0 0.0
          %527 = vmatprep.subr.mxu0 0.0
          %528 = vmatpush1.msra.mxu0 0.0
          %529 = vmatprep.subr.mxu0 0.0
          %530 = vmatpush1.msra.mxu0 0.0
          %531 = vmatprep.subr.mxu0 0.0
          %532 = vmatpush1.msra.mxu0 0.0
          %533 = vmatprep.subr.mxu0 0.0
          %534 = vmatpush1.msra.mxu0 0.0
          %535 = vmatprep.subr.mxu0 0.0
          %536 = vmatpush1.msra.mxu0 0.0
          %537 = vmatprep.subr.mxu0 0.0
          %538 = vmatpush1.msra.mxu0 0.0
          %539 = vmatprep.subr.mxu0 0.0
          %540 = vmatpush1.msra.mxu0 0.0
          %541 = vmatprep.subr.mxu0 0.0
          %542 = vmatpush1.msra.mxu0 0.0
          %543 = vmatprep.subr.mxu0 0.0
          %544 = vmatpush1.msra.mxu0 0.0
          %545 = vmatprep.mubr.f32.mxu0 0.0
          %546 = vmatmul.mubr.f32.gmra.mrb[0].mxu0 %v479
          %v547 = vpop.f32.mrb[0].mxu0
          %v548 = vadd.f32 %v477, %v547
          %v549 = vpop.f32.mrb[0].mxu0
          %550 = vdwg.mxu0
          %v551 = vpack.c.bf16 %v474, %v469
          %v553 = vunpack.c.l.b16 %v551
          %v554 = vunpack.c.h.b16 %v551
          %v555 = vpack.c.b16 %v553, %v553
          %v556 = vpack.c.b16 %v554, %v554
          %vm559 = vcmask 257024
          %560 = vst.msk [vmem:[#allocation4] sm:$0xf] %vm559, %v555
          %561 = vst.msk [vmem:[#allocation4 + $0x4] sm:$0xf] %vm559, %v556
          %vm562 = vcmask 253952
          %563 = vst.msk [vmem:[#allocation6] sm:$0x1] %vm562, %v548
        $region48: #{tpu_custom_call.1} parent=39 // pred_fallthru
          _
        // Predicated region
        $region49: #{tpu_custom_call.1} parent=39 // pred_check
          %p564 = pneg %p143
        $region50: #{tpu_custom_call.1} parent=39 // pred_check_branch
          %566 = sbr.rel (%p564) target = $region52
        $region51: #{tpu_custom_call.1} parent=39 // pred_region
          %s568 = ssub.s32 128, 128
          %569 = vsyncadd [#allocation5], %s568
          %s570 = sshll.u32 [#allocation4], 4
          %s571 = int_to_ptr.vmem [resolvable:$true] %s570
          %576 = dma.vmem_to_hbm [thread:$0]  %s571, 128, %s5, [#allocation5], 64, 64, 4
        $region52: #{tpu_custom_call.1} parent=39 // pred_fallthru
          _
        // Predicated region
        $region53: #{tpu_custom_call.1} parent=39 // pred_check
          %p577 = pneg %p164
        $region54: #{tpu_custom_call.1} parent=39 // pred_check_branch
          %579 = sbr.rel (%p577) target = $region56
        $region55: #{tpu_custom_call.1} parent=39 // pred_region
          %s581 = ssub.s32 16, 16
          %582 = vsyncadd [#allocation7], %s581
          %s584 = sshll.u32 [#allocation6], 4
          %s585 = int_to_ptr.vmem [resolvable:$true] %s584
          %587 = dma.vmem_to_hbm [thread:$0]  %s585, 16, %s6, [#allocation7]
        $region56: #{tpu_custom_call.1} parent=39 // pred_fallthru
          _
        // Predicated region
        $region57: #{tpu_custom_call.1} parent=39 // pred_check
          %p588 = pneg %p143
        $region58: #{tpu_custom_call.1} parent=39 // pred_check_branch
          %590 = sbr.rel (%p588) target = $region60
        $region59: #{tpu_custom_call.1} parent=39 // pred_region
          %591 = dma.done [#allocation5], 128
        $region60: #{tpu_custom_call.1} parent=39 // pred_fallthru
          _
        // Predicated region
        $region61: #{tpu_custom_call.1} parent=39 // pred_check
          %p592 = pneg %p164
        $region62: #{tpu_custom_call.1} parent=39 // pred_check_branch
          %594 = sbr.rel (%p592) target = $region64
        $region63: #{tpu_custom_call.1} parent=39 // pred_region
          %595 = dma.done [#allocation7], 16
        $region64: #{tpu_custom_call.1} parent=39 // pred_fallthru
          _
      $region40: #{tpu_custom_call.1} parent=5 // pred_fallthru
        _
      %p596 = scmp.le.s32.totalorder 2, %s15
      // Predicated region
      $region65: #{tpu_custom_call.1} parent=5 // pred_check
        %p597 = pneg %p596
      $region66: #{tpu_custom_call.1} parent=5 // pred_check_branch
        %599 = sbr.rel (%p597) target = $region68
      $region67: #{tpu_custom_call.1} parent=5 // pred_region
        %s600 = ssub.s32 %s15, 2
      $region68: #{tpu_custom_call.1} parent=5 // pred_fallthru
        _
    $region6: #{tpu_custom_call.1} parent=1 // loop_footer
      %s19 = sadd.s32 1, %s15
    $region7: #{tpu_custom_call.1} parent=1 // loop_footer_branch
      %14 = sbr.rel target = $region3
    $region8: #{tpu_custom_call.1} parent=1 // loop_exit
      _
    %601 = vsyncpa [#allocation5], 1
    %s602 = scalar_lea.sflag [#allocation5], 1
    %603 = vsyncpa %s602, 1
    %604 = vsyncpa [#allocation7], 1

</llo_original>
